<compile_context>
chip_gen: v7x
topology: tpu7x:2x2x1
jax: 0.10.0
libtpu: 0.0.40
codegen_flags: <defaults>
</compile_context>

<pallas_src>
import jax
import jax.numpy as jnp
from jax.experimental import pallas as pl
from jax.experimental.pallas import tpu as pltpu


LANE = 128          # TPU lane width; pad feature dims to this
BN_EPS = 1e-5       # matches torch.nn.BatchNorm1d default


def _round_up(x, m):
    return ((x + m - 1) // m) * m


def _pad2d(x, rows, cols):
    r, c = x.shape
    return jnp.pad(x, ((0, rows - r), (0, cols - c)))


# ----------------------------------------------------------------------------
# Fused Pallas kernel (whole forward pass, single grid step)
# ----------------------------------------------------------------------------
def make_fused_gcn_kernel(num_hidden, out_ch):
    """Builds the fused kernel.

    Refs:
      a_ref : (N, N)      bf16   normalized adjacency (VMEM-resident)
      x_ref : (N, 128)    bf16   padded node features
      w_ref : (L, 128, 128) bf16 stacked per-layer weights (BN folded in)
      s_ref : (L, 1, 128) f32    stacked per-layer shifts (bias+BN folded)
      o_ref : (N, 128)    f32    lane-dense log_softmax output
    Intermediates are SSA values — they never round-trip HBM.
    """
    def kernel(a_ref, x_ref, w_ref, s_ref, o_ref):
        h = x_ref[...]                                     # bf16 (N, 128)

        for li in range(num_hidden):
            # feature transform (MXU, bf16 in / f32 acc)
            xw = jnp.dot(h, w_ref[li], preferred_element_type=jnp.float32)
            # neighborhood aggregation (MXU); read A at the call site, do not
            # pin it in vregs across layers
            z = jnp.dot(a_ref[...], xw.astype(jnp.bfloat16),
                        preferred_element_type=jnp.float32)
            # folded bias + BatchNorm(eval) + ReLU: single add + max
            h = jnp.maximum(z + s_ref[li], jnp.float32(0.0)).astype(jnp.bfloat16)

        # final GCNConv + masked log_softmax over the real class columns
        xw = jnp.dot(h, w_ref[num_hidden], preferred_element_type=jnp.float32)
        z = jnp.dot(a_ref[...], xw.astype(jnp.bfloat16),
                    preferred_element_type=jnp.float32) + s_ref[num_hidden]
        col = jax.lax.broadcasted_iota(jnp.int32, z.shape, 1)
        z = jnp.where(col < out_ch, z, jnp.float32(-1e30))
        m = jnp.max(z, axis=-1, keepdims=True)
        s = z - m
        lse = jnp.log(jnp.sum(jnp.exp(s), axis=-1, keepdims=True))
        o_ref[...] = s - lse                               # lane-dense store

    return kernel


# ----------------------------------------------------------------------------
# Wrapper: fold BN into weights, stack per-layer params, one pallas_call
# ----------------------------------------------------------------------------
def _full_spec(shape):
    # full-array block -> (8,128) divisibility constraint is waived
    return pl.BlockSpec(shape, lambda i: (0,) * len(shape))


@jax.jit
def gcn_forward(params, x, a_hat):
    n, in_ch = x.shape
    num_layers = len(params["convs"])
    num_hidden = num_layers - 1
    hidden = params["convs"][0][0].shape[1]
    out_ch = params["convs"][-1][0].shape[1]

    # one common padded feature width so all layer weights stack
    kp = max(_round_up(in_ch, LANE), _round_up(hidden, LANE),
             _round_up(out_ch, LANE))

    a_bf = a_hat.astype(jnp.bfloat16)
    x_p = _pad2d(x, n, kp).astype(jnp.bfloat16)

    w_list, s_list = [], []
    for li in range(num_hidden):
        w, b = params["convs"][li]
        gamma, beta, mean, var = params["bns"][li]
        scale = gamma * jax.lax.rsqrt(var + jnp.float32(BN_EPS))  # (1, hidden)
        shift = beta - mean * scale
        w_fold = w * scale            # fold BN scale into weight columns (f32)
        s_fold = b * scale + shift    # fold conv bias + BN shift
        w_list.append(_pad2d(w_fold, kp, kp).astype(jnp.bfloat16))
        s_list.append(_pad2d(s_fold, 1, kp))
    w, b = params["convs"][-1]
    w_list.append(_pad2d(w, kp, kp).astype(jnp.bfloat16))
    s_list.append(_pad2d(b, 1, kp))

    w_stack = jnp.stack(w_list)       # (L, kp, kp) bf16
    s_stack = jnp.stack(s_list)       # (L, 1, kp)  f32

    # CostEstimate from REAL channel widths (not padded ones)
    flops = 0
    for (wr, _) in params["convs"]:
        fi, fo = wr.shape
        flops += 2 * n * fi * fo + 2 * n * n * fo
    bytes_accessed = (a_hat.size * 2 + x.size * 2
                      + sum(wr.size * 2 + br.size * 4
                            for (wr, br) in params["convs"])
                      + n * out_ch * 4)
    cost = pl.CostEstimate(flops=int(flops),
                           transcendentals=int(n * out_ch),
                           bytes_accessed=int(bytes_accessed))

    kernel = make_fused_gcn_kernel(num_hidden, out_ch)
    out_padded = pl.pallas_call(
        kernel,
        out_shape=jax.ShapeDtypeStruct((n, kp), jnp.float32),
        grid=(1,),
        in_specs=[_full_spec(a_bf.shape), _full_spec(x_p.shape),
                  _full_spec(w_stack.shape), _full_spec(s_stack.shape)],
        out_specs=_full_spec((n, kp)),
        compiler_params=pltpu.CompilerParams(
            dimension_semantics=("arbitrary",)),
        cost_estimate=cost,
    )(a_bf, x_p, w_stack, s_stack)
    return out_padded[:, :out_ch]


# ----------------------------------------------------------------------------
# Model: deterministic parameter init + pure-JAX reference + graph builder
# ----------------------------------------------------------------------------
def init_gcn_params(key, in_channels, hidden, out_channels, num_layers):
    dims = [in_channels] + [hidden] * (num_layers - 1) + [out_channels]
    params = {"convs": [], "bns": []}
    for li in range(num_layers):
        key, kw = jax.random.split(key)
        fan_in, fan_out = dims[li], dims[li + 1]
        limit = jnp.sqrt(6.0 / (fan_in + fan_out))   # glorot (PyG GCNConv)
        w = jax.random.uniform(kw, (fan_in, fan_out), jnp.float32, -limit, limit)
        b = jnp.zeros((1, fan_out), jnp.float32)
        params["convs"].append((w, b))
    for _ in range(num_layers - 1):
        key, kg, kb, km, kv = jax.random.split(key, 5)
        gamma = 1.0 + 0.1 * jax.random.normal(kg, (1, hidden), jnp.float32)
        beta = 0.1 * jax.random.normal(kb, (1, hidden), jnp.float32)
        mean = 0.1 * jax.random.normal(km, (1, hidden), jnp.float32)
        var = 1.0 + 0.1 * jax.random.uniform(kv, (1, hidden), jnp.float32)
        params["bns"].append((gamma, beta, mean, var))
    return params


def gcn_reference(params, x, a_hat):
    """Pure-JAX f32 eval-mode reference for correctness checking."""
    h = x
    for li in range(len(params["convs"]) - 1):
        w, b = params["convs"][li]
        gamma, beta, mean, var = params["bns"][li]
        h = a_hat @ (h @ w) + b
        h = (h - mean) * jax.lax.rsqrt(var + BN_EPS) * gamma + beta
        h = jnp.maximum(h, 0.0)
    w, b = params["convs"][-1]
    h = a_hat @ (h @ w) + b
    return jax.nn.log_softmax(h, axis=-1)


def build_normalized_adjacency(key, n, avg_degree=4):
    """Dense D^-1/2 (A + I) D^-1/2 from a random symmetric graph."""
    p = avg_degree / n
    u = jax.random.uniform(key, (n, n), jnp.float32)
    a = (u < p).astype(jnp.float32)
    a = jnp.maximum(a, a.T)
    a = a + jnp.eye(n, dtype=jnp.float32)
    a = jnp.minimum(a, 1.0)
    deg = jnp.sum(a, axis=1)
    d_inv_sqrt = 1.0 / jnp.sqrt(deg)
    return a * d_inv_sqrt[:, None] * d_inv_sqrt[None, :]


# ----------------------------------------------------------------------------
if __name__ == "__main__":
    N = 128            # number of nodes
    IN_CH = 16         # in_channels
    HIDDEN = 32        # hidden_size_gnn
    OUT_CH = 8         # out_channels (num classes)
    NUM_LAYERS = 3
    DROPOUT = 0.5      # identity in eval mode

    root = jax.random.PRNGKey(0)
    k_x, k_adj, k_par = jax.random.split(root, 3)

    x = jax.random.normal(k_x, (N, IN_CH), jnp.float32)
    a_hat = build_normalized_adjacency(k_adj, N)
    params = init_gcn_params(k_par, IN_CH, HIDDEN, OUT_CH, NUM_LAYERS)

    out = gcn_forward(params, x, a_hat)
    out = jax.block_until_ready(out)

    assert out.shape == (N, OUT_CH)
    # log-softmax rows must sum to ~1 in prob space
    assert jnp.allclose(jnp.sum(jnp.exp(out), axis=-1), 1.0, atol=1e-4)
    # matches the f32 reference within bf16-matmul tolerance
    ref = gcn_reference(params, x, a_hat)
    assert jnp.allclose(out, ref, atol=1e-1), float(jnp.max(jnp.abs(out - ref)))

    print("KERNEL_OK")
</pallas_src>

<mosaic_0001>
module attributes {stable_mosaic.version = 11 : i64} {
  func.func @kernel(%arg0: i32, %arg1: memref<128x128xbf16, #tpu.memory_space<vmem>>, %arg2: memref<128x128xbf16, #tpu.memory_space<vmem>>, %arg3: memref<3x128x128xbf16, #tpu.memory_space<vmem>>, %arg4: memref<3x1x128xf32, #tpu.memory_space<vmem>>, %arg5: memref<128x128xf32, #tpu.memory_space<vmem>>) attributes {dimension_semantics = [#tpu.dimension_semantics<arbitrary>], iteration_bounds = array<i64: 1>, scalar_prefetch = 0 : i64, scratch_operands = 0 : i64, tpu.core_type = #tpu.core_type<tc>, window_params = [{pipeline_mode = #tpu.pipeline_mode<synchronous>, transform_indices = @transform_0, window_bounds = array<i64: 128, 128>}, {pipeline_mode = #tpu.pipeline_mode<synchronous>, transform_indices = @transform_1, window_bounds = array<i64: 128, 128>}, {pipeline_mode = #tpu.pipeline_mode<synchronous>, transform_indices = @transform_2, window_bounds = array<i64: 3, 128, 128>}, {pipeline_mode = #tpu.pipeline_mode<synchronous>, transform_indices = @transform_3, window_bounds = array<i64: 3, 1, 128>}, {pipeline_mode = #tpu.pipeline_mode<synchronous>, transform_indices = @transform_4, window_bounds = array<i64: 128, 128>}]} {
    %c0 = arith.constant 0 : index
    %c0_0 = arith.constant 0 : index
    %0 = vector.load %arg2[%c0, %c0_0] : memref<128x128xbf16, #tpu.memory_space<vmem>>, vector<128x128xbf16>
    %c0_1 = arith.constant 0 : index
    %c0_2 = arith.constant 0 : index
    %c0_3 = arith.constant 0 : index
    %1 = vector.load %arg3[%c0_1, %c0_2, %c0_3] : memref<3x128x128xbf16, #tpu.memory_space<vmem>>, vector<1x128x128xbf16>
    %2 = vector.shape_cast %1 : vector<1x128x128xbf16> to vector<128x128xbf16>
    %cst = arith.constant dense<0.000000e+00> : vector<128x128xf32>
    %3 = tpu.matmul %0, %2, %cst {dimension_numbers = #tpu.dot_dimension_numbers<[1], [0], [0], [1], [0, 0, 1, 1], [], []>} : vector<128x128xbf16>, vector<128x128xbf16>, vector<128x128xf32> -> vector<128x128xf32>
    %c0_4 = arith.constant 0 : index
    %c0_5 = arith.constant 0 : index
    %4 = vector.load %arg1[%c0_4, %c0_5] : memref<128x128xbf16, #tpu.memory_space<vmem>>, vector<128x128xbf16>
    %5 = arith.truncf %3 : vector<128x128xf32> to vector<128x128xbf16>
    %cst_6 = arith.constant dense<0.000000e+00> : vector<128x128xf32>
    %6 = tpu.matmul %4, %5, %cst_6 {dimension_numbers = #tpu.dot_dimension_numbers<[1], [0], [0], [1], [0, 0, 1, 1], [], []>} : vector<128x128xbf16>, vector<128x128xbf16>, vector<128x128xf32> -> vector<128x128xf32>
    %c0_7 = arith.constant 0 : index
    %c0_8 = arith.constant 0 : index
    %c0_9 = arith.constant 0 : index
    %7 = vector.load %arg4[%c0_7, %c0_8, %c0_9] : memref<3x1x128xf32, #tpu.memory_space<vmem>>, vector<1x1x128xf32>
    %8 = vector.shape_cast %7 : vector<1x1x128xf32> to vector<1x128xf32>
    %9 = vector.broadcast %8 : vector<1x128xf32> to vector<128x128xf32>
    %10 = arith.addf %6, %9 : vector<128x128xf32>
    %cst_10 = arith.constant 0.000000e+00 : f32
    %11 = vector.broadcast %cst_10 : f32 to vector<128x128xf32>
    %12 = arith.maximumf %10, %11 : vector<128x128xf32>
    %13 = arith.truncf %12 : vector<128x128xf32> to vector<128x128xbf16>
    %c1 = arith.constant 1 : index
    %c0_11 = arith.constant 0 : index
    %c0_12 = arith.constant 0 : index
    %14 = vector.load %arg3[%c1, %c0_11, %c0_12] : memref<3x128x128xbf16, #tpu.memory_space<vmem>>, vector<1x128x128xbf16>
    %15 = vector.shape_cast %14 : vector<1x128x128xbf16> to vector<128x128xbf16>
    %cst_13 = arith.constant dense<0.000000e+00> : vector<128x128xf32>
    %16 = tpu.matmul %13, %15, %cst_13 {dimension_numbers = #tpu.dot_dimension_numbers<[1], [0], [0], [1], [0, 0, 1, 1], [], []>} : vector<128x128xbf16>, vector<128x128xbf16>, vector<128x128xf32> -> vector<128x128xf32>
    %c0_14 = arith.constant 0 : index
    %c0_15 = arith.constant 0 : index
    %17 = vector.load %arg1[%c0_14, %c0_15] : memref<128x128xbf16, #tpu.memory_space<vmem>>, vector<128x128xbf16>
    %18 = arith.truncf %16 : vector<128x128xf32> to vector<128x128xbf16>
    %cst_16 = arith.constant dense<0.000000e+00> : vector<128x128xf32>
    %19 = tpu.matmul %17, %18, %cst_16 {dimension_numbers = #tpu.dot_dimension_numbers<[1], [0], [0], [1], [0, 0, 1, 1], [], []>} : vector<128x128xbf16>, vector<128x128xbf16>, vector<128x128xf32> -> vector<128x128xf32>
    %c1_17 = arith.constant 1 : index
    %c0_18 = arith.constant 0 : index
    %c0_19 = arith.constant 0 : index
    %20 = vector.load %arg4[%c1_17, %c0_18, %c0_19] : memref<3x1x128xf32, #tpu.memory_space<vmem>>, vector<1x1x128xf32>
    %21 = vector.shape_cast %20 : vector<1x1x128xf32> to vector<1x128xf32>
    %22 = vector.broadcast %21 : vector<1x128xf32> to vector<128x128xf32>
    %23 = arith.addf %19, %22 : vector<128x128xf32>
    %cst_20 = arith.constant 0.000000e+00 : f32
    %24 = vector.broadcast %cst_20 : f32 to vector<128x128xf32>
    %25 = arith.maximumf %23, %24 : vector<128x128xf32>
    %26 = arith.truncf %25 : vector<128x128xf32> to vector<128x128xbf16>
    %c2 = arith.constant 2 : index
    %c0_21 = arith.constant 0 : index
    %c0_22 = arith.constant 0 : index
    %27 = vector.load %arg3[%c2, %c0_21, %c0_22] : memref<3x128x128xbf16, #tpu.memory_space<vmem>>, vector<1x128x128xbf16>
    %28 = vector.shape_cast %27 : vector<1x128x128xbf16> to vector<128x128xbf16>
    %cst_23 = arith.constant dense<0.000000e+00> : vector<128x128xf32>
    %29 = tpu.matmul %26, %28, %cst_23 {dimension_numbers = #tpu.dot_dimension_numbers<[1], [0], [0], [1], [0, 0, 1, 1], [], []>} : vector<128x128xbf16>, vector<128x128xbf16>, vector<128x128xf32> -> vector<128x128xf32>
    %c0_24 = arith.constant 0 : index
    %c0_25 = arith.constant 0 : index
    %30 = vector.load %arg1[%c0_24, %c0_25] : memref<128x128xbf16, #tpu.memory_space<vmem>>, vector<128x128xbf16>
    %31 = arith.truncf %29 : vector<128x128xf32> to vector<128x128xbf16>
    %cst_26 = arith.constant dense<0.000000e+00> : vector<128x128xf32>
    %32 = tpu.matmul %30, %31, %cst_26 {dimension_numbers = #tpu.dot_dimension_numbers<[1], [0], [0], [1], [0, 0, 1, 1], [], []>} : vector<128x128xbf16>, vector<128x128xbf16>, vector<128x128xf32> -> vector<128x128xf32>
    %c2_27 = arith.constant 2 : index
    %c0_28 = arith.constant 0 : index
    %c0_29 = arith.constant 0 : index
    %33 = vector.load %arg4[%c2_27, %c0_28, %c0_29] : memref<3x1x128xf32, #tpu.memory_space<vmem>>, vector<1x1x128xf32>
    %34 = vector.shape_cast %33 : vector<1x1x128xf32> to vector<1x128xf32>
    %35 = vector.broadcast %34 : vector<1x128xf32> to vector<128x128xf32>
    %36 = arith.addf %32, %35 : vector<128x128xf32>
    %37 = tpu.iota {dimensions = array<i32: 1>} : vector<128x128xi32>
    %c8_i32 = arith.constant 8 : i32
    %38 = vector.broadcast %c8_i32 : i32 to vector<128x128xi32>
    %39 = arith.cmpi slt, %37, %38 : vector<128x128xi32>
    %cst_30 = arith.constant -1.000000e+30 : f32
    %40 = vector.broadcast %cst_30 : f32 to vector<128x128xf32>
    %41 = arith.select %39, %36, %40 : vector<128x128xi1>, vector<128x128xf32>
    %cst_31 = arith.constant dense<0xFF800000> : vector<128xf32>
    %42 = vector.multi_reduction <maximumf>, %41, %cst_31 [1] : vector<128x128xf32> to vector<128xf32>
    %43 = vector.shape_cast %42 : vector<128xf32> to vector<128x1xf32>
    %44 = vector.broadcast %43 : vector<128x1xf32> to vector<128x128xf32>
    %45 = arith.subf %41, %44 : vector<128x128xf32>
    %46 = math.exp %45 : vector<128x128xf32>
    %cst_32 = arith.constant dense<0.000000e+00> : vector<128xf32>
    %47 = vector.multi_reduction <add>, %46, %cst_32 [1] : vector<128x128xf32> to vector<128xf32>
    %48 = vector.shape_cast %47 : vector<128xf32> to vector<128x1xf32>
    %49 = math.log %48 : vector<128x1xf32>
    %50 = vector.broadcast %49 : vector<128x1xf32> to vector<128x128xf32>
    %51 = arith.subf %45, %50 : vector<128x128xf32>
    %c0_33 = arith.constant 0 : index
    %c0_34 = arith.constant 0 : index
    %52 = vector.load %arg5[%c0_33, %c0_34] : memref<128x128xf32, #tpu.memory_space<vmem>>, vector<128x128xf32>
    tpu.vector_store %arg5[%c0_33, %c0_34], %51 {strides = array<i32>} : memref<128x128xf32, #tpu.memory_space<vmem>>, vector<128x128xf32>,
    return
  }
  func.func @transform_0(%arg0: i32) -> (i32, i32) {
    %c0_i32 = arith.constant 0 : i32
    %c0_i32_0 = arith.constant 0 : i32
    %c0_i32_1 = arith.constant 0 : i32
    return %c0_i32, %c0_i32_0 : i32, i32
  }
  func.func @transform_1(%arg0: i32) -> (i32, i32) {
    %c0_i32 = arith.constant 0 : i32
    %c0_i32_0 = arith.constant 0 : i32
    %c0_i32_1 = arith.constant 0 : i32
    return %c0_i32, %c0_i32_0 : i32, i32
  }
  func.func @transform_2(%arg0: i32) -> (i32, i32, i32) {
    %c0_i32 = arith.constant 0 : i32
    %c0_i32_0 = arith.constant 0 : i32
    %c0_i32_1 = arith.constant 0 : i32
    %c0_i32_2 = arith.constant 0 : i32
    return %c0_i32, %c0_i32_0, %c0_i32_1 : i32, i32, i32
  }
  func.func @transform_3(%arg0: i32) -> (i32, i32, i32) {
    %c0_i32 = arith.constant 0 : i32
    %c0_i32_0 = arith.constant 0 : i32
    %c0_i32_1 = arith.constant 0 : i32
    %c0_i32_2 = arith.constant 0 : i32
    return %c0_i32, %c0_i32_0, %c0_i32_1 : i32, i32, i32
  }
  func.func @transform_4(%arg0: i32) -> (i32, i32) {
    %c0_i32 = arith.constant 0 : i32
    %c0_i32_0 = arith.constant 0 : i32
    %c0_i32_1 = arith.constant 0 : i32
    return %c0_i32, %c0_i32_0 : i32, i32
  }
}

</mosaic_0001>

<llo_original>
// kernel: gcn_forward.1
$region0: #{gcn_forward.1}
  #allocation0 [shape = 'u32[]', space=smem, size = 0x4, offset = 0x4, fixed_abs, tag = 'smem constant byte address 0x4 - core index']
  #allocation1 [shape = 'u32[144,128]{1,0:T(1,128)}', space=vmem, size = 0x12000, scoped, tag = 'internal scratch']
  %s0 = inlined_call_operand.vmem [shape: bf16[128,128], index: 0, kind: input, shape index: {}]
  %s1 = inlined_call_operand.vmem [shape: bf16[128,128], index: 1, kind: input, shape index: {}]
  %s2 = inlined_call_operand.vmem [shape: bf16[3,128,128], index: 2, kind: input, shape index: {}]
  %s3 = inlined_call_operand.vmem [shape: f32[3,1,128], index: 3, kind: input, shape index: {}]
  %s4 = inlined_call_operand.vmem [shape: f32[128,128], index: 4, kind: output, shape index: {}]
  %s5 = sld [smem:[#allocation0]]
  $region26: #{gcn_forward.1} parent=0
    _
  %s7 = ssub.s32 1, %s5
  %s8 = scalar_select 0, %s7, %s5
  // Predicated region
  $region2: #{gcn_forward.1} parent=0 // pred_check
    _
  $region3: #{gcn_forward.1} parent=0 // pred_check_branch
    %10 = sbr.rel (0) target = $region5
  $region4: #{gcn_forward.1} parent=0 // pred_region
    _
  $region5: #{gcn_forward.1} parent=0 // pred_fallthru
    _
  // Predicated region
  $region6: #{gcn_forward.1} parent=0 // pred_check
    _
  $region7: #{gcn_forward.1} parent=0 // pred_check_branch
    %12 = sbr.rel (0) target = $region9
  $region8: #{gcn_forward.1} parent=0 // pred_region
    _
  $region9: #{gcn_forward.1} parent=0 // pred_fallthru
    _
  // Predicated region
  $region10: #{gcn_forward.1} parent=0 // pred_check
    _
  $region11: #{gcn_forward.1} parent=0 // pred_check_branch
    %14 = sbr.rel (0) target = $region13
  $region12: #{gcn_forward.1} parent=0 // pred_region
    _
  $region13: #{gcn_forward.1} parent=0 // pred_fallthru
    _
  // Predicated region
  $region14: #{gcn_forward.1} parent=0 // pred_check
    _
  $region15: #{gcn_forward.1} parent=0 // pred_check_branch
    %16 = sbr.rel (0) target = $region17
  $region16: #{gcn_forward.1} parent=0 // pred_region
    _
  $region17: #{gcn_forward.1} parent=0 // pred_fallthru
    _
  %v18 = vld [vmem:[%s1] sm:$0xf]
  %v19 = vld [vmem:[%s1 + $0x4] sm:$0xf]
  %v20 = vld [vmem:[%s1 + $0x8] sm:$0xf]
  %v21 = vld [vmem:[%s1 + $0xc] sm:$0xf]
  %v22 = vld [vmem:[%s1 + $0x10] sm:$0xf]
  %v23 = vld [vmem:[%s1 + $0x14] sm:$0xf]
  %v24 = vld [vmem:[%s1 + $0x18] sm:$0xf]
  %v25 = vld [vmem:[%s1 + $0x1c] sm:$0xf]
  %v26 = vld [vmem:[%s1 + $0x20] sm:$0xf]
  %v27 = vld [vmem:[%s1 + $0x24] sm:$0xf]
  %v28 = vld [vmem:[%s1 + $0x28] sm:$0xf]
  %v29 = vld [vmem:[%s1 + $0x2c] sm:$0xf]
  %v30 = vld [vmem:[%s1 + $0x30] sm:$0xf]
  %v31 = vld [vmem:[%s1 + $0x34] sm:$0xf]
  %v32 = vld [vmem:[%s1 + $0x38] sm:$0xf]
  %v33 = vld [vmem:[%s1 + $0x3c] sm:$0xf]
  %v34 = vld [vmem:[%s2] sm:$0xf]
  %v35 = vld [vmem:[%s2 + $0x4] sm:$0xf]
  %v36 = vld [vmem:[%s2 + $0x8] sm:$0xf]
  %v37 = vld [vmem:[%s2 + $0xc] sm:$0xf]
  %v38 = vld [vmem:[%s2 + $0x10] sm:$0xf]
  %v39 = vld [vmem:[%s2 + $0x14] sm:$0xf]
  %v40 = vld [vmem:[%s2 + $0x18] sm:$0xf]
  %v41 = vld [vmem:[%s2 + $0x1c] sm:$0xf]
  %v42 = vld [vmem:[%s2 + $0x20] sm:$0xf]
  %v43 = vld [vmem:[%s2 + $0x24] sm:$0xf]
  %v44 = vld [vmem:[%s2 + $0x28] sm:$0xf]
  %v45 = vld [vmem:[%s2 + $0x2c] sm:$0xf]
  %v46 = vld [vmem:[%s2 + $0x30] sm:$0xf]
  %v47 = vld [vmem:[%s2 + $0x34] sm:$0xf]
  %v48 = vld [vmem:[%s2 + $0x38] sm:$0xf]
  %v49 = vld [vmem:[%s2 + $0x3c] sm:$0xf]
  %v66 = vunpack.c.l.b16 %v18
  %v67 = vunpack.c.l.b16 %v19
  %v68 = vunpack.c.l.b16 %v20
  %v69 = vunpack.c.l.b16 %v21
  %v70 = vunpack.c.l.b16 %v22
  %v71 = vunpack.c.l.b16 %v23
  %v72 = vunpack.c.l.b16 %v24
  %v73 = vunpack.c.l.b16 %v25
  %v74 = vunpack.c.l.b16 %v26
  %v75 = vunpack.c.l.b16 %v27
  %v76 = vunpack.c.l.b16 %v28
  %v77 = vunpack.c.l.b16 %v29
  %v78 = vunpack.c.l.b16 %v30
  %v79 = vunpack.c.l.b16 %v31
  %v80 = vunpack.c.l.b16 %v32
  %v81 = vunpack.c.l.b16 %v33
  %v82 = vpack.c.b16 %v67, %v66
  %v83 = vpack.c.b16 %v69, %v68
  %v84 = vpack.c.b16 %v71, %v70
  %v85 = vpack.c.b16 %v73, %v72
  %v86 = vpack.c.b16 %v75, %v74
  %v87 = vpack.c.b16 %v77, %v76
  %v88 = vpack.c.b16 %v79, %v78
  %v89 = vpack.c.b16 %v81, %v80
  %v114 = vunpack.c.l.b16 %v34
  %v115 = vunpack.c.l.b16 %v35
  %v116 = vunpack.c.l.b16 %v36
  %v117 = vunpack.c.l.b16 %v37
  %v118 = vunpack.c.l.b16 %v38
  %v119 = vunpack.c.l.b16 %v39
  %v120 = vunpack.c.l.b16 %v40
  %v121 = vunpack.c.l.b16 %v41
  %v122 = vunpack.c.l.b16 %v42
  %v123 = vunpack.c.l.b16 %v43
  %v124 = vunpack.c.l.b16 %v44
  %v125 = vunpack.c.l.b16 %v45
  %v126 = vunpack.c.l.b16 %v46
  %v127 = vunpack.c.l.b16 %v47
  %v128 = vunpack.c.l.b16 %v48
  %v129 = vunpack.c.l.b16 %v49
  %v130 = vpack.c.b16 %v115, %v114
  %v131 = vpack.c.b16 %v117, %v116
  %v132 = vpack.c.b16 %v119, %v118
  %v133 = vpack.c.b16 %v121, %v120
  %v134 = vpack.c.b16 %v123, %v122
  %v135 = vpack.c.b16 %v125, %v124
  %v136 = vpack.c.b16 %v127, %v126
  %v137 = vpack.c.b16 %v129, %v128
  %146 = vmatprep.subr.bf16.mxu0 0
  %147 = vmatpush1.bf16.msra.mxu0 %v130
  %148 = vmatprep.subr.bf16.mxu0 0
  %149 = vmatpush1.bf16.msra.mxu0 %v131
  %150 = vmatprep.subr.bf16.mxu0 0
  %151 = vmatpush1.bf16.msra.mxu0 %v132
  %152 = vmatprep.subr.bf16.mxu0 0
  %153 = vmatpush1.bf16.msra.mxu0 %v133
  %154 = vmatprep.subr.bf16.mxu0 0
  %155 = vmatpush1.bf16.msra.mxu0 %v134
  %156 = vmatprep.subr.bf16.mxu0 0
  %157 = vmatpush1.bf16.msra.mxu0 %v135
  %158 = vmatprep.subr.bf16.mxu0 0
  %159 = vmatpush1.bf16.msra.mxu0 %v136
  %160 = vmatprep.subr.bf16.mxu0 0
  %161 = vmatpush1.bf16.msra.mxu0 %v137
  %162 = vmatprep.subr.bf16.mxu0 0
  %163 = vmatpush1.bf16.msra.mxu0 0
  %164 = vmatprep.subr.bf16.mxu0 0
  %165 = vmatpush1.bf16.msra.mxu0 0
  %166 = vmatprep.subr.bf16.mxu0 0
  %167 = vmatpush1.bf16.msra.mxu0 0
  %168 = vmatprep.subr.bf16.mxu0 0
  %169 = vmatpush1.bf16.msra.mxu0 0
  %170 = vmatprep.subr.bf16.mxu0 0
  %171 = vmatpush1.bf16.msra.mxu0 0
  %172 = vmatprep.subr.bf16.mxu0 0
  %173 = vmatpush1.bf16.msra.mxu0 0
  %174 = vmatprep.subr.bf16.mxu0 0
  %175 = vmatpush1.bf16.msra.mxu0 0
  %176 = vmatprep.subr.bf16.mxu0 0
  %177 = vmatpush1.bf16.msra.mxu0 0
  %178 = vmatprep.mubr.bf16.mxu0 0
  %179 = vmatmul.mubr.bf16.gmra.mrb[0].mxu0 %v82
  %v180 = vpop.f32.mrb[0].mxu0
  %v181 = vadd.f32 0.0, %v180
  %v182 = vpop.f32.mrb[0].mxu0
  %v183 = vpop.f32.mrb[0].mxu0
  %v184 = vadd.f32 0.0, %v183
  %v185 = vpop.f32.mrb[0].mxu0
  %186 = vmatprep.mubr.bf16.mxu0 0
  %187 = vmatmul.mubr.bf16.gmra.mrb[0].mxu0 %v83
  %v188 = vpop.f32.mrb[0].mxu0
  %v189 = vadd.f32 0.0, %v188
  %v190 = vpop.f32.mrb[0].mxu0
  %v191 = vpop.f32.mrb[0].mxu0
  %v192 = vadd.f32 0.0, %v191
  %v193 = vpop.f32.mrb[0].mxu0
  %194 = vmatprep.mubr.bf16.mxu0 0
  %195 = vmatmul.mubr.bf16.gmra.mrb[0].mxu0 %v84
  %v196 = vpop.f32.mrb[0].mxu0
  %v197 = vadd.f32 0.0, %v196
  %v198 = vpop.f32.mrb[0].mxu0
  %v199 = vpop.f32.mrb[0].mxu0
  %v200 = vadd.f32 0.0, %v199
  %v201 = vpop.f32.mrb[0].mxu0
  %202 = vmatprep.mubr.bf16.mxu0 0
  %203 = vmatmul.mubr.bf16.gmra.mrb[0].mxu0 %v85
  %v204 = vpop.f32.mrb[0].mxu0
  %v205 = vadd.f32 0.0, %v204
  %v206 = vpop.f32.mrb[0].mxu0
  %v207 = vpop.f32.mrb[0].mxu0
  %v208 = vadd.f32 0.0, %v207
  %v209 = vpop.f32.mrb[0].mxu0
  %210 = vmatprep.mubr.bf16.mxu0 0
  %211 = vmatmul.mubr.bf16.gmra.mrb[0].mxu0 %v86
  %v212 = vpop.f32.mrb[0].mxu0
  %v213 = vadd.f32 0.0, %v212
  %v214 = vpop.f32.mrb[0].mxu0
  %v215 = vpop.f32.mrb[0].mxu0
  %v216 = vadd.f32 0.0, %v215
  %v217 = vpop.f32.mrb[0].mxu0
  %218 = vmatprep.mubr.bf16.mxu0 0
  %219 = vmatmul.mubr.bf16.gmra.mrb[0].mxu0 %v87
  %v220 = vpop.f32.mrb[0].mxu0
  %v221 = vadd.f32 0.0, %v220
  %v222 = vpop.f32.mrb[0].mxu0
  %v223 = vpop.f32.mrb[0].mxu0
  %v224 = vadd.f32 0.0, %v223
  %v225 = vpop.f32.mrb[0].mxu0
  %226 = vmatprep.mubr.bf16.mxu0 0
  %227 = vmatmul.mubr.bf16.gmra.mrb[0].mxu0 %v88
  %v228 = vpop.f32.mrb[0].mxu0
  %v229 = vadd.f32 0.0, %v228
  %v230 = vpop.f32.mrb[0].mxu0
  %v231 = vpop.f32.mrb[0].mxu0
  %v232 = vadd.f32 0.0, %v231
  %v233 = vpop.f32.mrb[0].mxu0
  %234 = vmatprep.mubr.bf16.mxu0 0
  %235 = vmatmul.mubr.bf16.gmra.mrb[0].mxu0 %v89
  %v236 = vpop.f32.mrb[0].mxu0
  %v237 = vadd.f32 0.0, %v236
  %v238 = vpop.f32.mrb[0].mxu0
  %v239 = vpop.f32.mrb[0].mxu0
  %v240 = vadd.f32 0.0, %v239
  %v241 = vpop.f32.mrb[0].mxu0
  %242 = vdwg.mxu0
  %v243 = vld [vmem:[%s0] sm:$0xf]
  %v244 = vld [vmem:[%s0 + $0x4] sm:$0xf]
  %v245 = vld [vmem:[%s0 + $0x8] sm:$0xf]
  %v246 = vld [vmem:[%s0 + $0xc] sm:$0xf]
  %v247 = vld [vmem:[%s0 + $0x10] sm:$0xf]
  %v248 = vld [vmem:[%s0 + $0x14] sm:$0xf]
  %v249 = vld [vmem:[%s0 + $0x18] sm:$0xf]
  %v250 = vld [vmem:[%s0 + $0x1c] sm:$0xf]
  %v251 = vld [vmem:[%s0 + $0x20] sm:$0xf]
  %v252 = vld [vmem:[%s0 + $0x24] sm:$0xf]
  %v253 = vld [vmem:[%s0 + $0x28] sm:$0xf]
  %v254 = vld [vmem:[%s0 + $0x2c] sm:$0xf]
  %v255 = vld [vmem:[%s0 + $0x30] sm:$0xf]
  %v256 = vld [vmem:[%s0 + $0x34] sm:$0xf]
  %v257 = vld [vmem:[%s0 + $0x38] sm:$0xf]
  %v258 = vld [vmem:[%s0 + $0x3c] sm:$0xf]
  %v259 = vpack.c.bf16 %v184, %v181
  %v260 = vpack.c.bf16 %v192, %v189
  %v261 = vpack.c.bf16 %v200, %v197
  %v262 = vpack.c.bf16 %v208, %v205
  %v263 = vpack.c.bf16 %v216, %v213
  %v264 = vpack.c.bf16 %v224, %v221
  %v265 = vpack.c.bf16 %v232, %v229
  %v266 = vpack.c.bf16 %v240, %v237
  %v267 = vld [vmem:[%s3] sm:$0x1]
  %v269 = vlaneseq
  %v270 = vshrl.u32 %v269, 7
  %v271 = vsub.s32 0, %v270
  %v272 = vrot.slane %v267, %v271
  %v290 = vunpack.c.l.b16 %v243
  %v291 = vunpack.c.l.b16 %v244
  %v292 = vunpack.c.l.b16 %v245
  %v293 = vunpack.c.l.b16 %v246
  %v294 = vunpack.c.l.b16 %v247
  %v295 = vunpack.c.l.b16 %v248
  %v296 = vunpack.c.l.b16 %v249
  %v297 = vunpack.c.l.b16 %v250
  %v298 = vunpack.c.l.b16 %v251
  %v299 = vunpack.c.l.b16 %v252
  %v300 = vunpack.c.l.b16 %v253
  %v301 = vunpack.c.l.b16 %v254
  %v302 = vunpack.c.l.b16 %v255
  %v303 = vunpack.c.l.b16 %v256
  %v304 = vunpack.c.l.b16 %v257
  %v305 = vunpack.c.l.b16 %v258
  %v306 = vpack.c.b16 %v291, %v290
  %v307 = vpack.c.b16 %v293, %v292
  %v308 = vpack.c.b16 %v295, %v294
  %v309 = vpack.c.b16 %v297, %v296
  %v310 = vpack.c.b16 %v299, %v298
  %v311 = vpack.c.b16 %v301, %v300
  %v312 = vpack.c.b16 %v303, %v302
  %v313 = vpack.c.b16 %v305, %v304
  %322 = vmatprep.subr.bf16.mxu0 0
  %323 = vmatpush1.bf16.msra.mxu0 %v259
  %324 = vmatprep.subr.bf16.mxu0 0
  %325 = vmatpush1.bf16.msra.mxu0 %v260
  %326 = vmatprep.subr.bf16.mxu0 0
  %327 = vmatpush1.bf16.msra.mxu0 %v261
  %328 = vmatprep.subr.bf16.mxu0 0
  %329 = vmatpush1.bf16.msra.mxu0 %v262
  %330 = vmatprep.subr.bf16.mxu0 0
  %331 = vmatpush1.bf16.msra.mxu0 %v263
  %332 = vmatprep.subr.bf16.mxu0 0
  %333 = vmatpush1.bf16.msra.mxu0 %v264
  %334 = vmatprep.subr.bf16.mxu0 0
  %335 = vmatpush1.bf16.msra.mxu0 %v265
  %336 = vmatprep.subr.bf16.mxu0 0
  %337 = vmatpush1.bf16.msra.mxu0 %v266
  %338 = vmatprep.subr.bf16.mxu0 0
  %339 = vmatpush1.bf16.msra.mxu0 0
  %340 = vmatprep.subr.bf16.mxu0 0
  %341 = vmatpush1.bf16.msra.mxu0 0
  %342 = vmatprep.subr.bf16.mxu0 0
  %343 = vmatpush1.bf16.msra.mxu0 0
  %344 = vmatprep.subr.bf16.mxu0 0
  %345 = vmatpush1.bf16.msra.mxu0 0
  %346 = vmatprep.subr.bf16.mxu0 0
  %347 = vmatpush1.bf16.msra.mxu0 0
  %348 = vmatprep.subr.bf16.mxu0 0
  %349 = vmatpush1.bf16.msra.mxu0 0
  %350 = vmatprep.subr.bf16.mxu0 0
  %351 = vmatpush1.bf16.msra.mxu0 0
  %352 = vmatprep.subr.bf16.mxu0 0
  %353 = vmatpush1.bf16.msra.mxu0 0
  %354 = vmatprep.mubr.bf16.mxu0 0
  %355 = vmatmul.mubr.bf16.gmra.mrb[0].mxu0 %v306
  %v356 = vpop.f32.mrb[0].mxu0
  %v357 = vadd.f32 %v272, %v356
  %v358 = vpop.f32.mrb[0].mxu0
  %v359 = vpop.f32.mrb[0].mxu0
  %v360 = vadd.f32 %v272, %v359
  %v361 = vpop.f32.mrb[0].mxu0
  %362 = vmatprep.mubr.bf16.mxu0 0
  %363 = vmatmul.mubr.bf16.gmra.mrb[0].mxu0 %v307
  %v364 = vpop.f32.mrb[0].mxu0
  %v365 = vadd.f32 %v272, %v364
  %v366 = vpop.f32.mrb[0].mxu0
  %v367 = vpop.f32.mrb[0].mxu0
  %v368 = vadd.f32 %v272, %v367
  %v369 = vpop.f32.mrb[0].mxu0
  %370 = vmatprep.mubr.bf16.mxu0 0
  %371 = vmatmul.mubr.bf16.gmra.mrb[0].mxu0 %v308
  %v372 = vpop.f32.mrb[0].mxu0
  %v373 = vadd.f32 %v272, %v372
  %v374 = vpop.f32.mrb[0].mxu0
  %v375 = vpop.f32.mrb[0].mxu0
  %v376 = vadd.f32 %v272, %v375
  %v377 = vpop.f32.mrb[0].mxu0
  %378 = vmatprep.mubr.bf16.mxu0 0
  %379 = vmatmul.mubr.bf16.gmra.mrb[0].mxu0 %v309
  %v380 = vpop.f32.mrb[0].mxu0
  %v381 = vadd.f32 %v272, %v380
  %v382 = vpop.f32.mrb[0].mxu0
  %v383 = vpop.f32.mrb[0].mxu0
  %v384 = vadd.f32 %v272, %v383
  %v385 = vpop.f32.mrb[0].mxu0
  %386 = vmatprep.mubr.bf16.mxu0 0
  %387 = vmatmul.mubr.bf16.gmra.mrb[0].mxu0 %v310
  %v388 = vpop.f32.mrb[0].mxu0
  %v389 = vadd.f32 %v272, %v388
  %v390 = vpop.f32.mrb[0].mxu0
  %v391 = vpop.f32.mrb[0].mxu0
  %v392 = vadd.f32 %v272, %v391
  %v393 = vpop.f32.mrb[0].mxu0
  %394 = vmatprep.mubr.bf16.mxu0 0
  %395 = vmatmul.mubr.bf16.gmra.mrb[0].mxu0 %v311
  %v396 = vpop.f32.mrb[0].mxu0
  %v397 = vadd.f32 %v272, %v396
  %v398 = vpop.f32.mrb[0].mxu0
  %v399 = vpop.f32.mrb[0].mxu0
  %v400 = vadd.f32 %v272, %v399
  %v401 = vpop.f32.mrb[0].mxu0
  %402 = vmatprep.mubr.bf16.mxu0 0
  %403 = vmatmul.mubr.bf16.gmra.mrb[0].mxu0 %v312
  %v404 = vpop.f32.mrb[0].mxu0
  %v405 = vadd.f32 %v272, %v404
  %v406 = vpop.f32.mrb[0].mxu0
  %v407 = vpop.f32.mrb[0].mxu0
  %v408 = vadd.f32 %v272, %v407
  %v409 = vpop.f32.mrb[0].mxu0
  %410 = vmatprep.mubr.bf16.mxu0 0
  %411 = vmatmul.mubr.bf16.gmra.mrb[0].mxu0 %v313
  %v412 = vpop.f32.mrb[0].mxu0
  %v413 = vadd.f32 %v272, %v412
  %v414 = vpop.f32.mrb[0].mxu0
  %v415 = vpop.f32.mrb[0].mxu0
  %v416 = vadd.f32 %v272, %v415
  %v417 = vpop.f32.mrb[0].mxu0
  %418 = vdwg.mxu0
  %v419 = vmax.f32 %v357, 0.0
  %v420 = vmax.f32 %v360, 0.0
  %v421 = vmax.f32 %v365, 0.0
  %v422 = vmax.f32 %v368, 0.0
  %v423 = vmax.f32 %v373, 0.0
  %v424 = vmax.f32 %v376, 0.0
  %v425 = vmax.f32 %v381, 0.0
  %v426 = vmax.f32 %v384, 0.0
  %v427 = vmax.f32 %v389, 0.0
  %v428 = vmax.f32 %v392, 0.0
  %v429 = vmax.f32 %v397, 0.0
  %v430 = vmax.f32 %v400, 0.0
  %v431 = vmax.f32 %v405, 0.0
  %v432 = vmax.f32 %v408, 0.0
  %v433 = vmax.f32 %v413, 0.0
  %v434 = vmax.f32 %v416, 0.0
  %v435 = vpack.c.bf16 %v420, %v419
  %v436 = vpack.c.bf16 %v422, %v421
  %v437 = vpack.c.bf16 %v424, %v423
  %v438 = vpack.c.bf16 %v426, %v425
  %v439 = vpack.c.bf16 %v428, %v427
  %v440 = vpack.c.bf16 %v430, %v429
  %v441 = vpack.c.bf16 %v432, %v431
  %v442 = vpack.c.bf16 %v434, %v433
  %s443 = scalar_lea.vmem %s2, 64
  %v444 = vld [vmem:[%s443] sm:$0xf]
  %v445 = vld [vmem:[%s443 + $0x4] sm:$0xf]
  %v446 = vld [vmem:[%s443 + $0x8] sm:$0xf]
  %v447 = vld [vmem:[%s443 + $0xc] sm:$0xf]
  %v448 = vld [vmem:[%s443 + $0x10] sm:$0xf]
  %v449 = vld [vmem:[%s443 + $0x14] sm:$0xf]
  %v450 = vld [vmem:[%s443 + $0x18] sm:$0xf]
  %v451 = vld [vmem:[%s443 + $0x1c] sm:$0xf]
  %v452 = vld [vmem:[%s443 + $0x20] sm:$0xf]
  %v453 = vld [vmem:[%s443 + $0x24] sm:$0xf]
  %v454 = vld [vmem:[%s443 + $0x28] sm:$0xf]
  %v455 = vld [vmem:[%s443 + $0x2c] sm:$0xf]
  %v456 = vld [vmem:[%s443 + $0x30] sm:$0xf]
  %v457 = vld [vmem:[%s443 + $0x34] sm:$0xf]
  %v458 = vld [vmem:[%s443 + $0x38] sm:$0xf]
  %v459 = vld [vmem:[%s443 + $0x3c] sm:$0xf]
  %v476 = vunpack.c.l.b16 %v444
  %v477 = vunpack.c.l.b16 %v445
  %v478 = vunpack.c.l.b16 %v446
  %v479 = vunpack.c.l.b16 %v447
  %v480 = vunpack.c.l.b16 %v448
  %v481 = vunpack.c.l.b16 %v449
  %v482 = vunpack.c.l.b16 %v450
  %v483 = vunpack.c.l.b16 %v451
  %v484 = vunpack.c.l.b16 %v452
  %v485 = vunpack.c.l.b16 %v453
  %v486 = vunpack.c.l.b16 %v454
  %v487 = vunpack.c.l.b16 %v455
  %v488 = vunpack.c.l.b16 %v456
  %v489 = vunpack.c.l.b16 %v457
  %v490 = vunpack.c.l.b16 %v458
  %v491 = vunpack.c.l.b16 %v459
  %v492 = vpack.c.b16 %v477, %v476
  %v493 = vpack.c.b16 %v479, %v478
  %v494 = vpack.c.b16 %v481, %v480
  %v495 = vpack.c.b16 %v483, %v482
  %v496 = vpack.c.b16 %v485, %v484
  %v497 = vpack.c.b16 %v487, %v486
  %v498 = vpack.c.b16 %v489, %v488
  %v499 = vpack.c.b16 %v491, %v490
  %508 = vmatprep.subr.bf16.mxu0 0
  %509 = vmatpush1.bf16.msra.mxu0 %v492
  %510 = vmatprep.subr.bf16.mxu0 0
  %511 = vmatpush1.bf16.msra.mxu0 %v493
  %512 = vmatprep.subr.bf16.mxu0 0
  %513 = vmatpush1.bf16.msra.mxu0 %v494
  %514 = vmatprep.subr.bf16.mxu0 0
  %515 = vmatpush1.bf16.msra.mxu0 %v495
  %516 = vmatprep.subr.bf16.mxu0 0
  %517 = vmatpush1.bf16.msra.mxu0 %v496
  %518 = vmatprep.subr.bf16.mxu0 0
  %519 = vmatpush1.bf16.msra.mxu0 %v497
  %520 = vmatprep.subr.bf16.mxu0 0
  %521 = vmatpush1.bf16.msra.mxu0 %v498
  %522 = vmatprep.subr.bf16.mxu0 0
  %523 = vmatpush1.bf16.msra.mxu0 %v499
  %524 = vmatprep.subr.bf16.mxu0 0
  %525 = vmatpush1.bf16.msra.mxu0 0
  %526 = vmatprep.subr.bf16.mxu0 0
  %527 = vmatpush1.bf16.msra.mxu0 0
  %528 = vmatprep.subr.bf16.mxu0 0
  %529 = vmatpush1.bf16.msra.mxu0 0
  %530 = vmatprep.subr.bf16.mxu0 0
  %531 = vmatpush1.bf16.msra.mxu0 0
  %532 = vmatprep.subr.bf16.mxu0 0
  %533 = vmatpush1.bf16.msra.mxu0 0
  %534 = vmatprep.subr.bf16.mxu0 0
  %535 = vmatpush1.bf16.msra.mxu0 0
  %536 = vmatprep.subr.bf16.mxu0 0
  %537 = vmatpush1.bf16.msra.mxu0 0
  %538 = vmatprep.subr.bf16.mxu0 0
  %539 = vmatpush1.bf16.msra.mxu0 0
  %540 = vmatprep.mubr.bf16.mxu0 0
  %541 = vmatmul.mubr.bf16.gmra.mrb[0].mxu0 %v435
  %v542 = vpop.f32.mrb[0].mxu0
  %v543 = vadd.f32 0.0, %v542
  %v544 = vpop.f32.mrb[0].mxu0
  %v545 = vpop.f32.mrb[0].mxu0
  %v546 = vadd.f32 0.0, %v545
  %v547 = vpop.f32.mrb[0].mxu0
  %548 = vmatprep.mubr.bf16.mxu0 0
  %549 = vmatmul.mubr.bf16.gmra.mrb[0].mxu0 %v436
  %v550 = vpop.f32.mrb[0].mxu0
  %v551 = vadd.f32 0.0, %v550
  %v552 = vpop.f32.mrb[0].mxu0
  %v553 = vpop.f32.mrb[0].mxu0
  %v554 = vadd.f32 0.0, %v553
  %v555 = vpop.f32.mrb[0].mxu0
  %556 = vmatprep.mubr.bf16.mxu0 0
  %557 = vmatmul.mubr.bf16.gmra.mrb[0].mxu0 %v437
  %v558 = vpop.f32.mrb[0].mxu0
  %v559 = vadd.f32 0.0, %v558
  %v560 = vpop.f32.mrb[0].mxu0
  %v561 = vpop.f32.mrb[0].mxu0
  %v562 = vadd.f32 0.0, %v561
  %v563 = vpop.f32.mrb[0].mxu0
  %564 = vmatprep.mubr.bf16.mxu0 0
  %565 = vmatmul.mubr.bf16.gmra.mrb[0].mxu0 %v438
  %v566 = vpop.f32.mrb[0].mxu0
  %v567 = vadd.f32 0.0, %v566
  %v568 = vpop.f32.mrb[0].mxu0
  %v569 = vpop.f32.mrb[0].mxu0
  %v570 = vadd.f32 0.0, %v569
  %v571 = vpop.f32.mrb[0].mxu0
  %572 = vmatprep.mubr.bf16.mxu0 0
  %573 = vmatmul.mubr.bf16.gmra.mrb[0].mxu0 %v439
  %v574 = vpop.f32.mrb[0].mxu0
  %v575 = vadd.f32 0.0, %v574
  %v576 = vpop.f32.mrb[0].mxu0
  %v577 = vpop.f32.mrb[0].mxu0
  %v578 = vadd.f32 0.0, %v577
  %v579 = vpop.f32.mrb[0].mxu0
  %580 = vmatprep.mubr.bf16.mxu0 0
  %581 = vmatmul.mubr.bf16.gmra.mrb[0].mxu0 %v440
  %v582 = vpop.f32.mrb[0].mxu0
  %v583 = vadd.f32 0.0, %v582
  %v584 = vpop.f32.mrb[0].mxu0
  %v585 = vpop.f32.mrb[0].mxu0
  %v586 = vadd.f32 0.0, %v585
  %v587 = vpop.f32.mrb[0].mxu0
  %588 = vmatprep.mubr.bf16.mxu0 0
  %589 = vmatmul.mubr.bf16.gmra.mrb[0].mxu0 %v441
  %v590 = vpop.f32.mrb[0].mxu0
  %v591 = vadd.f32 0.0, %v590
  %v592 = vpop.f32.mrb[0].mxu0
  %v593 = vpop.f32.mrb[0].mxu0
  %v594 = vadd.f32 0.0, %v593
  %v595 = vpop.f32.mrb[0].mxu0
  %596 = vmatprep.mubr.bf16.mxu0 0
  %597 = vmatmul.mubr.bf16.gmra.mrb[0].mxu0 %v442
  %v598 = vpop.f32.mrb[0].mxu0
  %v599 = vadd.f32 0.0, %v598
  %v600 = vpop.f32.mrb[0].mxu0
  %v601 = vpop.f32.mrb[0].mxu0
  %v602 = vadd.f32 0.0, %v601
  %v603 = vpop.f32.mrb[0].mxu0
  %604 = vdwg.mxu0
  %v605 = vpack.c.bf16 %v546, %v543
  %v606 = vpack.c.bf16 %v554, %v551
  %v607 = vpack.c.bf16 %v562, %v559
  %v608 = vpack.c.bf16 %v570, %v567
  %v609 = vpack.c.bf16 %v578, %v575
  %v610 = vpack.c.bf16 %v586, %v583
  %v611 = vpack.c.bf16 %v594, %v591
  %v612 = vpack.c.bf16 %v602, %v599
  %s613 = scalar_lea.vmem %s3, 1
  %v614 = vld [vmem:[%s613] sm:$0x1]
  %v616 = vlaneseq
  %v617 = vshrl.u32 %v616, 7
  %v618 = vsub.s32 0, %v617
  %v619 = vrot.slane %v614, %v618
  %621 = vmatprep.subr.bf16.mxu0 0
  %622 = vmatpush1.bf16.msra.mxu0 %v605
  %623 = vmatprep.subr.bf16.mxu0 0
  %624 = vmatpush1.bf16.msra.mxu0 %v606
  %625 = vmatprep.subr.bf16.mxu0 0
  %626 = vmatpush1.bf16.msra.mxu0 %v607
  %627 = vmatprep.subr.bf16.mxu0 0
  %628 = vmatpush1.bf16.msra.mxu0 %v608
  %629 = vmatprep.subr.bf16.mxu0 0
  %630 = vmatpush1.bf16.msra.mxu0 %v609
  %631 = vmatprep.subr.bf16.mxu0 0
  %632 = vmatpush1.bf16.msra.mxu0 %v610
  %633 = vmatprep.subr.bf16.mxu0 0
  %634 = vmatpush1.bf16.msra.mxu0 %v611
  %635 = vmatprep.subr.bf16.mxu0 0
  %636 = vmatpush1.bf16.msra.mxu0 %v612
  %637 = vmatprep.subr.bf16.mxu0 0
  %638 = vmatpush1.bf16.msra.mxu0 0
  %639 = vmatprep.subr.bf16.mxu0 0
  %640 = vmatpush1.bf16.msra.mxu0 0
  %641 = vmatprep.subr.bf16.mxu0 0
  %642 = vmatpush1.bf16.msra.mxu0 0
  %643 = vmatprep.subr.bf16.mxu0 0
  %644 = vmatpush1.bf16.msra.mxu0 0
  %645 = vmatprep.subr.bf16.mxu0 0
  %646 = vmatpush1.bf16.msra.mxu0 0
  %647 = vmatprep.subr.bf16.mxu0 0
  %648 = vmatpush1.bf16.msra.mxu0 0
  %649 = vmatprep.subr.bf16.mxu0 0
  %650 = vmatpush1.bf16.msra.mxu0 0
  %651 = vmatprep.subr.bf16.mxu0 0
  %652 = vmatpush1.bf16.msra.mxu0 0
  %653 = vmatprep.mubr.bf16.mxu0 0
  %654 = vmatmul.mubr.bf16.gmra.mrb[0].mxu0 %v306
  %v655 = vpop.f32.mrb[0].mxu0
  %v656 = vadd.f32 %v619, %v655
  %v657 = vpop.f32.mrb[0].mxu0
  %v658 = vpop.f32.mrb[0].mxu0
  %v659 = vadd.f32 %v619, %v658
  %v660 = vpop.f32.mrb[0].mxu0
  %661 = vmatprep.mubr.bf16.mxu0 0
  %662 = vmatmul.mubr.bf16.gmra.mrb[0].mxu0 %v307
  %v663 = vpop.f32.mrb[0].mxu0
  %v664 = vadd.f32 %v619, %v663
  %v665 = vpop.f32.mrb[0].mxu0
  %v666 = vpop.f32.mrb[0].mxu0
  %v667 = vadd.f32 %v619, %v666
  %v668 = vpop.f32.mrb[0].mxu0
  %669 = vmatprep.mubr.bf16.mxu0 0
  %670 = vmatmul.mubr.bf16.gmra.mrb[0].mxu0 %v308
  %v671 = vpop.f32.mrb[0].mxu0
  %v672 = vadd.f32 %v619, %v671
  %v673 = vpop.f32.mrb[0].mxu0
  %v674 = vpop.f32.mrb[0].mxu0
  %v675 = vadd.f32 %v619, %v674
  %v676 = vpop.f32.mrb[0].mxu0
  %677 = vmatprep.mubr.bf16.mxu0 0
  %678 = vmatmul.mubr.bf16.gmra.mrb[0].mxu0 %v309
  %v679 = vpop.f32.mrb[0].mxu0
  %v680 = vadd.f32 %v619, %v679
  %v681 = vpop.f32.mrb[0].mxu0
  %v682 = vpop.f32.mrb[0].mxu0
  %v683 = vadd.f32 %v619, %v682
  %v684 = vpop.f32.mrb[0].mxu0
  %685 = vmatprep.mubr.bf16.mxu0 0
  %686 = vmatmul.mubr.bf16.gmra.mrb[0].mxu0 %v310
  %v687 = vpop.f32.mrb[0].mxu0
  %v688 = vadd.f32 %v619, %v687
  %v689 = vpop.f32.mrb[0].mxu0
  %v690 = vpop.f32.mrb[0].mxu0
  %v691 = vadd.f32 %v619, %v690
  %v692 = vpop.f32.mrb[0].mxu0
  %693 = vmatprep.mubr.bf16.mxu0 0
  %694 = vmatmul.mubr.bf16.gmra.mrb[0].mxu0 %v311
  %v695 = vpop.f32.mrb[0].mxu0
  %v696 = vadd.f32 %v619, %v695
  %v697 = vpop.f32.mrb[0].mxu0
  %v698 = vpop.f32.mrb[0].mxu0
  %v699 = vadd.f32 %v619, %v698
  %v700 = vpop.f32.mrb[0].mxu0
  %701 = vmatprep.mubr.bf16.mxu0 0
  %702 = vmatmul.mubr.bf16.gmra.mrb[0].mxu0 %v312
  %v703 = vpop.f32.mrb[0].mxu0
  %v704 = vadd.f32 %v619, %v703
  %v705 = vpop.f32.mrb[0].mxu0
  %v706 = vpop.f32.mrb[0].mxu0
  %v707 = vadd.f32 %v619, %v706
  %v708 = vpop.f32.mrb[0].mxu0
  %709 = vmatprep.mubr.bf16.mxu0 0
  %710 = vmatmul.mubr.bf16.gmra.mrb[0].mxu0 %v313
  %v711 = vpop.f32.mrb[0].mxu0
  %v712 = vadd.f32 %v619, %v711
  %v713 = vpop.f32.mrb[0].mxu0
  %v714 = vpop.f32.mrb[0].mxu0
  %v715 = vadd.f32 %v619, %v714
  %v716 = vpop.f32.mrb[0].mxu0
  %717 = vdwg.mxu0
  %v718 = vmax.f32 %v656, 0.0
  %v719 = vmax.f32 %v659, 0.0
  %v720 = vmax.f32 %v664, 0.0
  %v721 = vmax.f32 %v667, 0.0
  %v722 = vmax.f32 %v672, 0.0
  %v723 = vmax.f32 %v675, 0.0
  %v724 = vmax.f32 %v680, 0.0
  %v725 = vmax.f32 %v683, 0.0
  %v726 = vmax.f32 %v688, 0.0
  %v727 = vmax.f32 %v691, 0.0
  %v728 = vmax.f32 %v696, 0.0
  %v729 = vmax.f32 %v699, 0.0
  %v730 = vmax.f32 %v704, 0.0
  %v731 = vmax.f32 %v707, 0.0
  %v732 = vmax.f32 %v712, 0.0
  %v733 = vmax.f32 %v715, 0.0
  %v734 = vpack.c.bf16 %v719, %v718
  %v735 = vpack.c.bf16 %v721, %v720
  %v736 = vpack.c.bf16 %v723, %v722
  %v737 = vpack.c.bf16 %v725, %v724
  %v738 = vpack.c.bf16 %v727, %v726
  %v739 = vpack.c.bf16 %v729, %v728
  %v740 = vpack.c.bf16 %v731, %v730
  %v741 = vpack.c.bf16 %v733, %v732
  %s742 = scalar_lea.vmem %s2, 128
  %v743 = vld [vmem:[%s742] sm:$0xf]
  %v744 = vld [vmem:[%s742 + $0x4] sm:$0xf]
  %v745 = vld [vmem:[%s742 + $0x8] sm:$0xf]
  %v746 = vld [vmem:[%s742 + $0xc] sm:$0xf]
  %v747 = vld [vmem:[%s742 + $0x10] sm:$0xf]
  %v748 = vld [vmem:[%s742 + $0x14] sm:$0xf]
  %v749 = vld [vmem:[%s742 + $0x18] sm:$0xf]
  %v750 = vld [vmem:[%s742 + $0x1c] sm:$0xf]
  %v751 = vld [vmem:[%s742 + $0x20] sm:$0xf]
  %v752 = vld [vmem:[%s742 + $0x24] sm:$0xf]
  %v753 = vld [vmem:[%s742 + $0x28] sm:$0xf]
  %v754 = vld [vmem:[%s742 + $0x2c] sm:$0xf]
  %v755 = vld [vmem:[%s742 + $0x30] sm:$0xf]
  %v756 = vld [vmem:[%s742 + $0x34] sm:$0xf]
  %v757 = vld [vmem:[%s742 + $0x38] sm:$0xf]
  %v758 = vld [vmem:[%s742 + $0x3c] sm:$0xf]
  %v775 = vunpack.c.l.b16 %v743
  %v776 = vunpack.c.l.b16 %v744
  %v777 = vunpack.c.l.b16 %v745
  %v778 = vunpack.c.l.b16 %v746
  %v779 = vunpack.c.l.b16 %v747
  %v780 = vunpack.c.l.b16 %v748
  %v781 = vunpack.c.l.b16 %v749
  %v782 = vunpack.c.l.b16 %v750
  %v783 = vunpack.c.l.b16 %v751
  %v784 = vunpack.c.l.b16 %v752
  %v785 = vunpack.c.l.b16 %v753
  %v786 = vunpack.c.l.b16 %v754
  %v787 = vunpack.c.l.b16 %v755
  %v788 = vunpack.c.l.b16 %v756
  %v789 = vunpack.c.l.b16 %v757
  %v790 = vunpack.c.l.b16 %v758
  %v791 = vpack.c.b16 %v776, %v775
  %v792 = vpack.c.b16 %v778, %v777
  %v793 = vpack.c.b16 %v780, %v779
  %v794 = vpack.c.b16 %v782, %v781
  %v795 = vpack.c.b16 %v784, %v783
  %v796 = vpack.c.b16 %v786, %v785
  %v797 = vpack.c.b16 %v788, %v787
  %v798 = vpack.c.b16 %v790, %v789
  %807 = vmatprep.subr.bf16.mxu0 0
  %808 = vmatpush1.bf16.msra.mxu0 %v791
  %809 = vmatprep.subr.bf16.mxu0 0
  %810 = vmatpush1.bf16.msra.mxu0 %v792
  %811 = vmatprep.subr.bf16.mxu0 0
  %812 = vmatpush1.bf16.msra.mxu0 %v793
  %813 = vmatprep.subr.bf16.mxu0 0
  %814 = vmatpush1.bf16.msra.mxu0 %v794
  %815 = vmatprep.subr.bf16.mxu0 0
  %816 = vmatpush1.bf16.msra.mxu0 %v795
  %817 = vmatprep.subr.bf16.mxu0 0
  %818 = vmatpush1.bf16.msra.mxu0 %v796
  %819 = vmatprep.subr.bf16.mxu0 0
  %820 = vmatpush1.bf16.msra.mxu0 %v797
  %821 = vmatprep.subr.bf16.mxu0 0
  %822 = vmatpush1.bf16.msra.mxu0 %v798
  %823 = vmatprep.subr.bf16.mxu0 0
  %824 = vmatpush1.bf16.msra.mxu0 0
  %825 = vmatprep.subr.bf16.mxu0 0
  %826 = vmatpush1.bf16.msra.mxu0 0
  %827 = vmatprep.subr.bf16.mxu0 0
  %828 = vmatpush1.bf16.msra.mxu0 0
  %829 = vmatprep.subr.bf16.mxu0 0
  %830 = vmatpush1.bf16.msra.mxu0 0
  %831 = vmatprep.subr.bf16.mxu0 0
  %832 = vmatpush1.bf16.msra.mxu0 0
  %833 = vmatprep.subr.bf16.mxu0 0
  %834 = vmatpush1.bf16.msra.mxu0 0
  %835 = vmatprep.subr.bf16.mxu0 0
  %836 = vmatpush1.bf16.msra.mxu0 0
  %837 = vmatprep.subr.bf16.mxu0 0
  %838 = vmatpush1.bf16.msra.mxu0 0
  %839 = vmatprep.mubr.bf16.mxu0 0
  %840 = vmatmul.mubr.bf16.gmra.mrb[0].mxu0 %v734
  %v841 = vpop.f32.mrb[0].mxu0
  %v842 = vadd.f32 0.0, %v841
  %v843 = vpop.f32.mrb[0].mxu0
  %v844 = vpop.f32.mrb[0].mxu0
  %v845 = vadd.f32 0.0, %v844
  %v846 = vpop.f32.mrb[0].mxu0
  %847 = vmatprep.mubr.bf16.mxu0 0
  %848 = vmatmul.mubr.bf16.gmra.mrb[0].mxu0 %v735
  %v849 = vpop.f32.mrb[0].mxu0
  %v850 = vadd.f32 0.0, %v849
  %v851 = vpop.f32.mrb[0].mxu0
  %v852 = vpop.f32.mrb[0].mxu0
  %v853 = vadd.f32 0.0, %v852
  %v854 = vpop.f32.mrb[0].mxu0
  %855 = vmatprep.mubr.bf16.mxu0 0
  %856 = vmatmul.mubr.bf16.gmra.mrb[0].mxu0 %v736
  %v857 = vpop.f32.mrb[0].mxu0
  %v858 = vadd.f32 0.0, %v857
  %v859 = vpop.f32.mrb[0].mxu0
  %v860 = vpop.f32.mrb[0].mxu0
  %v861 = vadd.f32 0.0, %v860
  %v862 = vpop.f32.mrb[0].mxu0
  %863 = vmatprep.mubr.bf16.mxu0 0
  %864 = vmatmul.mubr.bf16.gmra.mrb[0].mxu0 %v737
  %v865 = vpop.f32.mrb[0].mxu0
  %v866 = vadd.f32 0.0, %v865
  %v867 = vpop.f32.mrb[0].mxu0
  %v868 = vpop.f32.mrb[0].mxu0
  %v869 = vadd.f32 0.0, %v868
  %v870 = vpop.f32.mrb[0].mxu0
  %871 = vmatprep.mubr.bf16.mxu0 0
  %872 = vmatmul.mubr.bf16.gmra.mrb[0].mxu0 %v738
  %v873 = vpop.f32.mrb[0].mxu0
  %v874 = vadd.f32 0.0, %v873
  %v875 = vpop.f32.mrb[0].mxu0
  %v876 = vpop.f32.mrb[0].mxu0
  %v877 = vadd.f32 0.0, %v876
  %v878 = vpop.f32.mrb[0].mxu0
  %879 = vmatprep.mubr.bf16.mxu0 0
  %880 = vmatmul.mubr.bf16.gmra.mrb[0].mxu0 %v739
  %v881 = vpop.f32.mrb[0].mxu0
  %v882 = vadd.f32 0.0, %v881
  %v883 = vpop.f32.mrb[0].mxu0
  %v884 = vpop.f32.mrb[0].mxu0
  %v885 = vadd.f32 0.0, %v884
  %v886 = vpop.f32.mrb[0].mxu0
  %887 = vmatprep.mubr.bf16.mxu0 0
  %888 = vmatmul.mubr.bf16.gmra.mrb[0].mxu0 %v740
  %v889 = vpop.f32.mrb[0].mxu0
  %v890 = vadd.f32 0.0, %v889
  %v891 = vpop.f32.mrb[0].mxu0
  %v892 = vpop.f32.mrb[0].mxu0
  %v893 = vadd.f32 0.0, %v892
  %v894 = vpop.f32.mrb[0].mxu0
  %895 = vmatprep.mubr.bf16.mxu0 0
  %896 = vmatmul.mubr.bf16.gmra.mrb[0].mxu0 %v741
  %v897 = vpop.f32.mrb[0].mxu0
  %v898 = vadd.f32 0.0, %v897
  %v899 = vpop.f32.mrb[0].mxu0
  %v900 = vpop.f32.mrb[0].mxu0
  %v901 = vadd.f32 0.0, %v900
  %v902 = vpop.f32.mrb[0].mxu0
  %903 = vdwg.mxu0
  %v904 = vpack.c.bf16 %v845, %v842
  %v905 = vpack.c.bf16 %v853, %v850
  %v906 = vpack.c.bf16 %v861, %v858
  %v907 = vpack.c.bf16 %v869, %v866
  %v908 = vpack.c.bf16 %v877, %v874
  %v909 = vpack.c.bf16 %v885, %v882
  %v910 = vpack.c.bf16 %v893, %v890
  %v911 = vpack.c.bf16 %v901, %v898
  %s912 = scalar_lea.vmem %s3, 2
  %v913 = vld [vmem:[%s912] sm:$0x1]
  %v915 = vlaneseq
  %v916 = vshrl.u32 %v915, 7
  %v917 = vsub.s32 0, %v916
  %v918 = vrot.slane %v913, %v917
  %920 = vmatprep.subr.bf16.mxu0 0
  %921 = vmatpush1.bf16.msra.mxu0 %v904
  %922 = vmatprep.subr.bf16.mxu0 0
  %923 = vmatpush1.bf16.msra.mxu0 %v905
  %924 = vmatprep.subr.bf16.mxu0 0
  %925 = vmatpush1.bf16.msra.mxu0 %v906
  %926 = vmatprep.subr.bf16.mxu0 0
  %927 = vmatpush1.bf16.msra.mxu0 %v907
  %928 = vmatprep.subr.bf16.mxu0 0
  %929 = vmatpush1.bf16.msra.mxu0 %v908
  %930 = vmatprep.subr.bf16.mxu0 0
  %931 = vmatpush1.bf16.msra.mxu0 %v909
  %932 = vmatprep.subr.bf16.mxu0 0
  %933 = vmatpush1.bf16.msra.mxu0 %v910
  %934 = vmatprep.subr.bf16.mxu0 0
  %935 = vmatpush1.bf16.msra.mxu0 %v911
  %936 = vmatprep.subr.bf16.mxu0 0
  %937 = vmatpush1.bf16.msra.mxu0 0
  %938 = vmatprep.subr.bf16.mxu0 0
  %939 = vmatpush1.bf16.msra.mxu0 0
  %940 = vmatprep.subr.bf16.mxu0 0
  %941 = vmatpush1.bf16.msra.mxu0 0
  %942 = vmatprep.subr.bf16.mxu0 0
  %943 = vmatpush1.bf16.msra.mxu0 0
  %944 = vmatprep.subr.bf16.mxu0 0
  %945 = vmatpush1.bf16.msra.mxu0 0
  %946 = vmatprep.subr.bf16.mxu0 0
  %947 = vmatpush1.bf16.msra.mxu0 0
  %948 = vmatprep.subr.bf16.mxu0 0
  %949 = vmatpush1.bf16.msra.mxu0 0
  %950 = vmatprep.subr.bf16.mxu0 0
  %951 = vmatpush1.bf16.msra.mxu0 0
  %952 = vmatprep.mubr.bf16.mxu0 0
  %953 = vmatmul.mubr.bf16.gmra.mrb[0].mxu0 %v306
  %v954 = vpop.f32.mrb[0].mxu0
  %v955 = vadd.f32 %v918, %v954
  %v956 = vpop.f32.mrb[0].mxu0
  %v957 = vpop.f32.mrb[0].mxu0
  %v958 = vadd.f32 %v918, %v957
  %v959 = vpop.f32.mrb[0].mxu0
  %960 = vmatprep.mubr.bf16.mxu0 0
  %961 = vmatmul.mubr.bf16.gmra.mrb[0].mxu0 %v307
  %v962 = vpop.f32.mrb[0].mxu0
  %v963 = vadd.f32 %v918, %v962
  %v964 = vpop.f32.mrb[0].mxu0
  %v965 = vpop.f32.mrb[0].mxu0
  %v966 = vadd.f32 %v918, %v965
  %v967 = vpop.f32.mrb[0].mxu0
  %968 = vmatprep.mubr.bf16.mxu0 0
  %969 = vmatmul.mubr.bf16.gmra.mrb[0].mxu0 %v308
  %v970 = vpop.f32.mrb[0].mxu0
  %v971 = vadd.f32 %v918, %v970
  %v972 = vpop.f32.mrb[0].mxu0
  %v973 = vpop.f32.mrb[0].mxu0
  %v974 = vadd.f32 %v918, %v973
  %v975 = vpop.f32.mrb[0].mxu0
  %976 = vmatprep.mubr.bf16.mxu0 0
  %977 = vmatmul.mubr.bf16.gmra.mrb[0].mxu0 %v309
  %v978 = vpop.f32.mrb[0].mxu0
  %v979 = vadd.f32 %v918, %v978
  %v980 = vpop.f32.mrb[0].mxu0
  %v981 = vpop.f32.mrb[0].mxu0
  %v982 = vadd.f32 %v918, %v981
  %v983 = vpop.f32.mrb[0].mxu0
  %984 = vmatprep.mubr.bf16.mxu0 0
  %985 = vmatmul.mubr.bf16.gmra.mrb[0].mxu0 %v310
  %v986 = vpop.f32.mrb[0].mxu0
  %v987 = vadd.f32 %v918, %v986
  %v988 = vpop.f32.mrb[0].mxu0
  %v989 = vpop.f32.mrb[0].mxu0
  %v990 = vadd.f32 %v918, %v989
  %v991 = vpop.f32.mrb[0].mxu0
  %992 = vmatprep.mubr.bf16.mxu0 0
  %993 = vmatmul.mubr.bf16.gmra.mrb[0].mxu0 %v311
  %v994 = vpop.f32.mrb[0].mxu0
  %v995 = vadd.f32 %v918, %v994
  %v996 = vpop.f32.mrb[0].mxu0
  %v997 = vpop.f32.mrb[0].mxu0
  %v998 = vadd.f32 %v918, %v997
  %v999 = vpop.f32.mrb[0].mxu0
  %1000 = vmatprep.mubr.bf16.mxu0 0
  %1001 = vmatmul.mubr.bf16.gmra.mrb[0].mxu0 %v312
  %v1002 = vpop.f32.mrb[0].mxu0
  %v1003 = vadd.f32 %v918, %v1002
  %v1004 = vpop.f32.mrb[0].mxu0
  %v1005 = vpop.f32.mrb[0].mxu0
  %v1006 = vadd.f32 %v918, %v1005
  %v1007 = vpop.f32.mrb[0].mxu0
  %1008 = vmatprep.mubr.bf16.mxu0 0
  %1009 = vmatmul.mubr.bf16.gmra.mrb[0].mxu0 %v313
  %v1010 = vpop.f32.mrb[0].mxu0
  %v1011 = vadd.f32 %v918, %v1010
  %v1012 = vpop.f32.mrb[0].mxu0
  %v1013 = vpop.f32.mrb[0].mxu0
  %v1014 = vadd.f32 %v918, %v1013
  %v1015 = vpop.f32.mrb[0].mxu0
  %1016 = vdwg.mxu0
  %v1017 = vlaneseq
  %v1018 = vand.u32 %v1017, 127
  %vm1019 = vcmp.lt.s32.totalorder %v1018, 8
  %v1020 = vsel %vm1019, %v955, -1e+30
  %v1021 = vsel %vm1019, %v958, -1e+30
  %v1022 = vsel %vm1019, %v963, -1e+30
  %v1023 = vsel %vm1019, %v966, -1e+30
  %v1024 = vsel %vm1019, %v971, -1e+30
  %v1025 = vsel %vm1019, %v974, -1e+30
  %v1026 = vsel %vm1019, %v979, -1e+30
  %v1027 = vsel %vm1019, %v982, -1e+30
  %v1028 = vsel %vm1019, %v987, -1e+30
  %v1029 = vsel %vm1019, %v990, -1e+30
  %v1030 = vsel %vm1019, %v995, -1e+30
  %v1031 = vsel %vm1019, %v998, -1e+30
  %v1032 = vsel %vm1019, %v1003, -1e+30
  %v1033 = vsel %vm1019, %v1006, -1e+30
  %v1034 = vsel %vm1019, %v1011, -1e+30
  %v1035 = vsel %vm1019, %v1014, -1e+30
  %1036 = vmax.xlane.f32.xlu0 %v1020
  %v1037 = vpop.xlane.xlu0 %1036
  %1038 = vmax.xlane.f32.xlu0 %v1021
  %v1039 = vpop.xlane.xlu0 %1038
  %1040 = vmax.xlane.f32.xlu0 %v1022
  %v1041 = vpop.xlane.xlu0 %1040
  %1042 = vmax.xlane.f32.xlu0 %v1023
  %v1043 = vpop.xlane.xlu0 %1042
  %1044 = vmax.xlane.f32.xlu0 %v1024
  %v1045 = vpop.xlane.xlu0 %1044
  %1046 = vmax.xlane.f32.xlu0 %v1025
  %v1047 = vpop.xlane.xlu0 %1046
  %1048 = vmax.xlane.f32.xlu0 %v1026
  %v1049 = vpop.xlane.xlu0 %1048
  %1050 = vmax.xlane.f32.xlu0 %v1027
  %v1051 = vpop.xlane.xlu0 %1050
  %1052 = vmax.xlane.f32.xlu0 %v1028
  %v1053 = vpop.xlane.xlu0 %1052
  %1054 = vmax.xlane.f32.xlu0 %v1029
  %v1055 = vpop.xlane.xlu0 %1054
  %1056 = vmax.xlane.f32.xlu0 %v1030
  %v1057 = vpop.xlane.xlu0 %1056
  %1058 = vmax.xlane.f32.xlu0 %v1031
  %v1059 = vpop.xlane.xlu0 %1058
  %1060 = vmax.xlane.f32.xlu0 %v1032
  %v1061 = vpop.xlane.xlu0 %1060
  %1062 = vmax.xlane.f32.xlu0 %v1033
  %v1063 = vpop.xlane.xlu0 %1062
  %1064 = vmax.xlane.f32.xlu0 %v1034
  %v1065 = vpop.xlane.xlu0 %1064
  %1066 = vmax.xlane.f32.xlu0 %v1035
  %v1067 = vpop.xlane.xlu0 %1066
  %v1068 = vsub.f32 %v1020, %v1037
  %v1069 = vsub.f32 %v1021, %v1039
  %v1070 = vsub.f32 %v1022, %v1041
  %v1071 = vsub.f32 %v1023, %v1043
  %v1072 = vsub.f32 %v1024, %v1045
  %v1073 = vsub.f32 %v1025, %v1047
  %v1074 = vsub.f32 %v1026, %v1049
  %v1075 = vsub.f32 %v1027, %v1051
  %v1076 = vsub.f32 %v1028, %v1053
  %v1077 = vsub.f32 %v1029, %v1055
  %v1078 = vsub.f32 %v1030, %v1057
  %v1079 = vsub.f32 %v1031, %v1059
  %v1080 = vsub.f32 %v1032, %v1061
  %v1081 = vsub.f32 %v1033, %v1063
  %v1082 = vsub.f32 %v1034, %v1065
  %v1083 = vsub.f32 %v1035, %v1067
  %v1084 = vmul.f32 %v1068, 1.442695
  %v1085 = vpow.pop %v1084
  %v1086 = vmul.f32 %v1069, 1.442695
  %v1087 = vpow.pop %v1086
  %v1088 = vmul.f32 %v1070, 1.442695
  %v1089 = vpow.pop %v1088
  %v1090 = vmul.f32 %v1071, 1.442695
  %v1091 = vpow.pop %v1090
  %v1092 = vmul.f32 %v1072, 1.442695
  %v1093 = vpow.pop %v1092
  %v1094 = vmul.f32 %v1073, 1.442695
  %v1095 = vpow.pop %v1094
  %v1096 = vmul.f32 %v1074, 1.442695
  %v1097 = vpow.pop %v1096
  %v1098 = vmul.f32 %v1075, 1.442695
  %v1099 = vpow.pop %v1098
  %v1100 = vmul.f32 %v1076, 1.442695
  %v1101 = vpow.pop %v1100
  %v1102 = vmul.f32 %v1077, 1.442695
  %v1103 = vpow.pop %v1102
  %v1104 = vmul.f32 %v1078, 1.442695
  %v1105 = vpow.pop %v1104
  %v1106 = vmul.f32 %v1079, 1.442695
  %v1107 = vpow.pop %v1106
  %v1108 = vmul.f32 %v1080, 1.442695
  %v1109 = vpow.pop %v1108
  %v1110 = vmul.f32 %v1081, 1.442695
  %v1111 = vpow.pop %v1110
  %v1112 = vmul.f32 %v1082, 1.442695
  %v1113 = vpow.pop %v1112
  %v1114 = vmul.f32 %v1083, 1.442695
  %v1115 = vpow.pop %v1114
  %1116 = vadd.xlane.f32.xlu0 %v1085
  %v1117 = vpop.xlane.xlu0 %1116
  %1118 = vadd.xlane.f32.xlu0 %v1087
  %v1119 = vpop.xlane.xlu0 %1118
  %1120 = vadd.xlane.f32.xlu0 %v1089
  %v1121 = vpop.xlane.xlu0 %1120
  %1122 = vadd.xlane.f32.xlu0 %v1091
  %v1123 = vpop.xlane.xlu0 %1122
  %1124 = vadd.xlane.f32.xlu0 %v1093
  %v1125 = vpop.xlane.xlu0 %1124
  %1126 = vadd.xlane.f32.xlu0 %v1095
  %v1127 = vpop.xlane.xlu0 %1126
  %1128 = vadd.xlane.f32.xlu0 %v1097
  %v1129 = vpop.xlane.xlu0 %1128
  %1130 = vadd.xlane.f32.xlu0 %v1099
  %v1131 = vpop.xlane.xlu0 %1130
  %1132 = vadd.xlane.f32.xlu0 %v1101
  %v1133 = vpop.xlane.xlu0 %1132
  %1134 = vadd.xlane.f32.xlu0 %v1103
  %v1135 = vpop.xlane.xlu0 %1134
  %1136 = vadd.xlane.f32.xlu0 %v1105
  %v1137 = vpop.xlane.xlu0 %1136
  %1138 = vadd.xlane.f32.xlu0 %v1107
  %v1139 = vpop.xlane.xlu0 %1138
  %1140 = vadd.xlane.f32.xlu0 %v1109
  %v1141 = vpop.xlane.xlu0 %1140
  %1142 = vadd.xlane.f32.xlu0 %v1111
  %v1143 = vpop.xlane.xlu0 %1142
  %1144 = vadd.xlane.f32.xlu0 %v1113
  %v1145 = vpop.xlane.xlu0 %1144
  %1146 = vadd.xlane.f32.xlu0 %v1115
  %v1147 = vpop.xlane.xlu0 %1146
  %v1148 = vlog2.pop %v1117
  %v1149 = vmul.f32 %v1148, 0.6931472
  %v1150 = vlog2.pop %v1119
  %v1151 = vmul.f32 %v1150, 0.6931472
  %v1152 = vlog2.pop %v1121
  %v1153 = vmul.f32 %v1152, 0.6931472
  %v1154 = vlog2.pop %v1123
  %v1155 = vmul.f32 %v1154, 0.6931472
  %v1156 = vlog2.pop %v1125
  %v1157 = vmul.f32 %v1156, 0.6931472
  %v1158 = vlog2.pop %v1127
  %v1159 = vmul.f32 %v1158, 0.6931472
  %v1160 = vlog2.pop %v1129
  %v1161 = vmul.f32 %v1160, 0.6931472
  %v1162 = vlog2.pop %v1131
  %v1163 = vmul.f32 %v1162, 0.6931472
  %v1164 = vlog2.pop %v1133
  %v1165 = vmul.f32 %v1164, 0.6931472
  %v1166 = vlog2.pop %v1135
  %v1167 = vmul.f32 %v1166, 0.6931472
  %v1168 = vlog2.pop %v1137
  %v1169 = vmul.f32 %v1168, 0.6931472
  %v1170 = vlog2.pop %v1139
  %v1171 = vmul.f32 %v1170, 0.6931472
  %v1172 = vlog2.pop %v1141
  %v1173 = vmul.f32 %v1172, 0.6931472
  %v1174 = vlog2.pop %v1143
  %v1175 = vmul.f32 %v1174, 0.6931472
  %v1176 = vlog2.pop %v1145
  %v1177 = vmul.f32 %v1176, 0.6931472
  %v1178 = vlog2.pop %v1147
  %v1179 = vmul.f32 %v1178, 0.6931472
  %v1180 = vsub.f32 %v1068, %v1149
  %v1181 = vsub.f32 %v1069, %v1151
  %v1182 = vsub.f32 %v1070, %v1153
  %v1183 = vsub.f32 %v1071, %v1155
  %v1184 = vsub.f32 %v1072, %v1157
  %v1185 = vsub.f32 %v1073, %v1159
  %v1186 = vsub.f32 %v1074, %v1161
  %v1187 = vsub.f32 %v1075, %v1163
  %v1188 = vsub.f32 %v1076, %v1165
  %v1189 = vsub.f32 %v1077, %v1167
  %v1190 = vsub.f32 %v1078, %v1169
  %v1191 = vsub.f32 %v1079, %v1171
  %v1192 = vsub.f32 %v1080, %v1173
  %v1193 = vsub.f32 %v1081, %v1175
  %v1194 = vsub.f32 %v1082, %v1177
  %v1195 = vsub.f32 %v1083, %v1179
  %1196 = vst [vmem:[%s4] sm:$0xff] %v1180
  %1197 = vst [vmem:[%s4 + $0x8] sm:$0xff] %v1181
  %1198 = vst [vmem:[%s4 + $0x10] sm:$0xff] %v1182
  %1199 = vst [vmem:[%s4 + $0x18] sm:$0xff] %v1183
  %1200 = vst [vmem:[%s4 + $0x20] sm:$0xff] %v1184
  %1201 = vst [vmem:[%s4 + $0x28] sm:$0xff] %v1185
  %1202 = vst [vmem:[%s4 + $0x30] sm:$0xff] %v1186
  %1203 = vst [vmem:[%s4 + $0x38] sm:$0xff] %v1187
  %1204 = vst [vmem:[%s4 + $0x40] sm:$0xff] %v1188
  %1205 = vst [vmem:[%s4 + $0x48] sm:$0xff] %v1189
  %1206 = vst [vmem:[%s4 + $0x50] sm:$0xff] %v1190
  %1207 = vst [vmem:[%s4 + $0x58] sm:$0xff] %v1191
  %1208 = vst [vmem:[%s4 + $0x60] sm:$0xff] %v1192
  %1209 = vst [vmem:[%s4 + $0x68] sm:$0xff] %v1193
  %1210 = vst [vmem:[%s4 + $0x70] sm:$0xff] %v1194
  %1211 = vst [vmem:[%s4 + $0x78] sm:$0xff] %v1195
  // Predicated region
  $region18: #{gcn_forward.1} parent=0 // pred_check
    _
  $region19: #{gcn_forward.1} parent=0 // pred_check_branch
    %1213 = sbr.rel (0) target = $region21
  $region20: #{gcn_forward.1} parent=0 // pred_region
    _
  $region21: #{gcn_forward.1} parent=0 // pred_fallthru
    _
  // Predicated region
  $region22: #{gcn_forward.1} parent=0 // pred_check
    _
  $region23: #{gcn_forward.1} parent=0 // pred_check_branch
    %1215 = sbr.rel (0) target = $region25
  $region24: #{gcn_forward.1} parent=0 // pred_region
    _
  $region25: #{gcn_forward.1} parent=0 // pred_fallthru
    _

</llo_original>
